<compile_context>
chip_gen: v6e
topology: v6e:2x2x1
jax: 0.10.0
libtpu: 0.0.40
codegen_flags: <defaults>
</compile_context>

<pallas_src>
import functools

import jax
import jax.numpy as jnp
from jax.experimental import pallas as pl
from jax.experimental.pallas import tpu as pltpu

_LANES = 128
_SUBLANES = 8


def _mse_kernel(x_ref, y_ref, out_ref, acc_ref, *, tr, tiles_per_slice, rows,
                full_tiles):
    """Per-slice partial sum of (x - y)^2 over row tiles.

    Grid = (num_slices, tiles_per_slice): axis 0 is parallel (one slice per
    TensorCore on 2-TC chips), axis 1 is the sequential reduction axis.
    acc_ref is an (8, 128) f32 running accumulator; only VALU adds in the hot
    loop, the sublane/lane collapse happens in the JAX wrapper.
    """
    c = pl.program_id(0)
    i = pl.program_id(1)
    tile = c * tiles_per_slice + i        # logical tile index (may exceed data)

    @pl.when(i == 0)
    def _init():
        acc_ref[...] = jnp.zeros_like(acc_ref)

    # Fast path: tile lies entirely inside the data -> no mask.
    @pl.when(tile < full_tiles)
    def _full_tile():
        x = x_ref[...].astype(jnp.float32)            # (tr, 128)
        y = y_ref[...].astype(jnp.float32)
        d = x - y
        acc_ref[...] += (d * d).reshape(tr // _SUBLANES, _SUBLANES, _LANES).sum(axis=0)

    # Ragged / duplicated tile (at most one per slice): mask invalid rows.
    # The input index_map clamps the DMA to a valid block; the mask below uses
    # the LOGICAL tile index, so clamped/garbage rows contribute exactly zero.
    @pl.when(tile >= full_tiles)
    def _ragged_tile():
        x = x_ref[...].astype(jnp.float32)
        y = y_ref[...].astype(jnp.float32)
        d = x - y
        row = jax.lax.broadcasted_iota(jnp.int32, (tr, _LANES), 0)
        valid = (tile * tr + row) < rows
        sq = jnp.where(valid, d * d, 0.0)
        acc_ref[...] += sq.reshape(tr // _SUBLANES, _SUBLANES, _LANES).sum(axis=0)

    @pl.when(i == tiles_per_slice - 1)
    def _finalize():
        out_ref[...] = acc_ref[...].reshape(1, _SUBLANES, _LANES)


def _tensorcores_per_chip():
    """Best-effort count of TensorCores a single Pallas grid can shard over."""
    try:
        kind = jax.devices()[0].device_kind.lower()
    except Exception:  # pragma: no cover
        return 1
    # v4 / v5p (megacore) and v7x have 2 TensorCores per device; v5e/v6e have 1.
    if "v5p" in kind or "v4" in kind or "v7" in kind or "7x" in kind:
        return 2
    return 1


@functools.partial(jax.jit, static_argnames=("tile_rows",))
def mse_loss(pred, target, *, tile_rows=4096):
    """Mean squared error over all elements (torch.nn.MSELoss, reduction='mean')."""
    assert pred.shape == target.shape, (pred.shape, target.shape)
    n = pred.size

    x = pred.reshape(-1)       # free reshape, native dtype
    y = target.reshape(-1)

    rows = n // _LANES
    rem = n - rows * _LANES

    tail = jnp.float32(0.0)
    if rem:
        # <=127 trailing elements that don't fill a 128-lane row: reduce them
        # with a tiny XLA op instead of padding/copying the whole stream.
        tx = x[rows * _LANES:].astype(jnp.float32)
        ty = y[rows * _LANES:].astype(jnp.float32)
        td = tx - ty
        tail = jnp.sum(td * td)

    if rows == 0:
        # Fewer than 128 elements total: nothing for the kernel to do.
        return tail / jnp.float32(n)

    # Lane-dense 2-D view of the 128-aligned prefix. For n % 128 == 0 this is a
    # pure reshape (no HBM copy); only 128-unaligned sizes pay a prefix slice.
    xm = x[: rows * _LANES].reshape(rows, _LANES)
    ym = y[: rows * _LANES].reshape(rows, _LANES)

    # Sublane-align the row tile to the packed-dtype multiple
    # (8 for f32, 16 for bf16, 32 for int8/fp8).
    sub = max(
        _SUBLANES,
        32 // jnp.dtype(pred.dtype).itemsize,
        32 // jnp.dtype(target.dtype).itemsize,
    )
    tr = min(int(tile_rows), max(sub, rows))
    tr = ((tr + sub - 1) // sub) * sub

    total_tiles = pl.cdiv(rows, tr)     # number of row-blocks in the data
    full_tiles = rows // tr             # blocks that need no masking

    num_slices = min(_tensorcores_per_chip(), total_tiles)
    tiles_per_slice = pl.cdiv(total_tiles, num_slices)

    def in_map(c, i):
        # Clamp so the DMA never walks past the last real block; duplicated /
        # ragged tiles are zeroed by the in-kernel mask.
        return (jnp.minimum(c * tiles_per_slice + i, total_tiles - 1), 0)

    kernel = functools.partial(
        _mse_kernel, tr=tr, tiles_per_slice=tiles_per_slice, rows=rows,
        full_tiles=full_tiles)

    partials = pl.pallas_call(
        kernel,
        out_shape=jax.ShapeDtypeStruct((num_slices, _SUBLANES, _LANES), jnp.float32),
        grid_spec=pltpu.PrefetchScalarGridSpec(
            num_scalar_prefetch=0,
            grid=(num_slices, tiles_per_slice),
            in_specs=[
                pl.BlockSpec((tr, _LANES), in_map),
                pl.BlockSpec((tr, _LANES), in_map),
            ],
            out_specs=pl.BlockSpec((1, _SUBLANES, _LANES), lambda c, i: (c, 0, 0)),
            scratch_shapes=[pltpu.VMEM((_SUBLANES, _LANES), jnp.float32)],
        ),
        compiler_params=pltpu.CompilerParams(
            dimension_semantics=("parallel", "arbitrary"),
            vmem_limit_bytes=32 * 1024 * 1024,
        ),
        cost_estimate=pl.CostEstimate(
            flops=3 * rows * _LANES,
            transcendentals=0,
            bytes_accessed=rows * _LANES
            * (jnp.dtype(pred.dtype).itemsize + jnp.dtype(target.dtype).itemsize)
            + num_slices * _SUBLANES * _LANES * 4,
        ),
    )(xm, ym)

    total = jnp.sum(partials) + tail
    return total / jnp.float32(n)


def mse_loss_reference(pred, target):
    """Pure-JAX mirror of torch.nn.MSELoss()(input, target)."""
    d = pred.astype(jnp.float32) - target.astype(jnp.float32)
    return jnp.mean(d * d)


if __name__ == "__main__":
    key = jax.random.PRNGKey(0)
    k1, k2, k3, k4 = jax.random.split(key, 4)

    # Primary case (module-typical dense tensors).
    N, C, H, W = 2, 4, 16, 16
    inp = jax.random.normal(k1, (N, C, H, W), dtype=jnp.float32)
    tgt = jax.random.normal(k2, (N, C, H, W), dtype=jnp.float32)
    loss = jax.block_until_ready(mse_loss(inp, tgt))
    ref = jax.block_until_ready(mse_loss_reference(inp, tgt))
    assert jnp.isfinite(loss), "kernel produced non-finite loss"
    assert jnp.allclose(loss, ref, rtol=1e-5, atol=1e-6), (loss, ref)

    # Ragged case: n = 945 (not a multiple of 128) -> exercises the in-kernel
    # row mask and the <128-element tail path, with no padding copies.
    inp2 = jax.random.normal(k3, (3, 5, 7, 9), dtype=jnp.float32)
    tgt2 = jax.random.normal(k4, (3, 5, 7, 9), dtype=jnp.float32)
    loss2 = jax.block_until_ready(mse_loss(inp2, tgt2))
    ref2 = jax.block_until_ready(mse_loss_reference(inp2, tgt2))
    assert jnp.allclose(loss2, ref2, rtol=1e-5, atol=1e-6), (loss2, ref2)

    # bf16 case: exercises the dtype-aware sublane rounding (16 for bf16) and
    # the in-kernel upcast (HBM reads stay bf16).
    loss3 = jax.block_until_ready(mse_loss(inp.astype(jnp.bfloat16),
                                           tgt.astype(jnp.bfloat16)))
    ref3 = jax.block_until_ready(mse_loss_reference(inp.astype(jnp.bfloat16),
                                                    tgt.astype(jnp.bfloat16)))
    assert jnp.allclose(loss3, ref3, rtol=1e-3, atol=1e-4), (loss3, ref3)

    print("KERNEL_OK")
</pallas_src>

<mosaic_0001>
module attributes {stable_mosaic.version = 11 : i64} {
  func.func @_mse_kernel(%arg0: i32, %arg1: i32, %arg2: memref<16x128xf32, #tpu.memory_space<vmem>>, %arg3: memref<16x128xf32, #tpu.memory_space<vmem>>, %arg4: memref<1x8x128xf32, #tpu.memory_space<vmem>>, %arg5: memref<8x128xf32, #tpu.memory_space<vmem>>) attributes {dimension_semantics = [#tpu.dimension_semantics<parallel>, #tpu.dimension_semantics<arbitrary>], iteration_bounds = array<i64: 1, 1>, scalar_prefetch = 0 : i64, scratch_operands = 1 : i64, tpu.core_type = #tpu.core_type<tc>, window_params = [{transform_indices = @transform_0, window_bounds = array<i64: 16, 128>}, {transform_indices = @transform_1, window_bounds = array<i64: 16, 128>}, {transform_indices = @transform_2, window_bounds = array<i64: 1, 8, 128>}]} {
    %c1_i32 = arith.constant 1 : i32
    %0 = arith.muli %arg0, %c1_i32 : i32
    %1 = arith.addi %0, %arg1 : i32
    %c0_i32 = arith.constant 0 : i32
    %2 = arith.cmpi eq, %arg1, %c0_i32 : i32
    %3 = arith.extui %2 : i1 to i32
    %c0_i32_0 = arith.constant 0 : i32
    %4 = arith.cmpi ne, %3, %c0_i32_0 : i32
    scf.if %4 {
      %cst = arith.constant 0.000000e+00 : f32
      %14 = vector.broadcast %cst : f32 to vector<8x128xf32>
      %c0 = arith.constant 0 : index
      %c0_7 = arith.constant 0 : index
      %15 = vector.load %arg5[%c0, %c0_7] : memref<8x128xf32, #tpu.memory_space<vmem>>, vector<8x128xf32>
      tpu.vector_store %arg5[%c0, %c0_7], %14 {strides = array<i32>} : memref<8x128xf32, #tpu.memory_space<vmem>>, vector<8x128xf32>,
    } else {
    }
    %c1_i32_1 = arith.constant 1 : i32
    %5 = arith.cmpi slt, %1, %c1_i32_1 : i32
    %6 = arith.extui %5 : i1 to i32
    %c0_i32_2 = arith.constant 0 : i32
    %7 = arith.cmpi ne, %6, %c0_i32_2 : i32
    scf.if %7 {
      %c0 = arith.constant 0 : index
      %c0_7 = arith.constant 0 : index
      %14 = vector.load %arg2[%c0, %c0_7] : memref<16x128xf32, #tpu.memory_space<vmem>>, vector<16x128xf32>
      %c0_8 = arith.constant 0 : index
      %c0_9 = arith.constant 0 : index
      %15 = vector.load %arg3[%c0_8, %c0_9] : memref<16x128xf32, #tpu.memory_space<vmem>>, vector<16x128xf32>
      %16 = arith.subf %14, %15 : vector<16x128xf32>
      %c0_10 = arith.constant 0 : index
      %c0_11 = arith.constant 0 : index
      %17 = vector.load %arg5[%c0_10, %c0_11] : memref<8x128xf32, #tpu.memory_space<vmem>>, vector<8x128xf32>
      %18 = arith.mulf %16, %16 : vector<16x128xf32>
      %19 = vector.shape_cast %18 : vector<16x128xf32> to vector<2x8x128xf32>
      %cst = arith.constant dense<0.000000e+00> : vector<8x128xf32>
      %20 = vector.multi_reduction <add>, %19, %cst [0] : vector<2x8x128xf32> to vector<8x128xf32>
      %21 = arith.addf %17, %20 : vector<8x128xf32>
      %c0_12 = arith.constant 0 : index
      %c0_13 = arith.constant 0 : index
      %22 = vector.load %arg5[%c0_12, %c0_13] : memref<8x128xf32, #tpu.memory_space<vmem>>, vector<8x128xf32>
      tpu.vector_store %arg5[%c0_12, %c0_13], %21 {strides = array<i32>} : memref<8x128xf32, #tpu.memory_space<vmem>>, vector<8x128xf32>,
    } else {
    }
    %c1_i32_3 = arith.constant 1 : i32
    %8 = arith.cmpi sge, %1, %c1_i32_3 : i32
    %9 = arith.extui %8 : i1 to i32
    %c0_i32_4 = arith.constant 0 : i32
    %10 = arith.cmpi ne, %9, %c0_i32_4 : i32
    scf.if %10 {
      %c0 = arith.constant 0 : index
      %c0_7 = arith.constant 0 : index
      %14 = vector.load %arg2[%c0, %c0_7] : memref<16x128xf32, #tpu.memory_space<vmem>>, vector<16x128xf32>
      %c0_8 = arith.constant 0 : index
      %c0_9 = arith.constant 0 : index
      %15 = vector.load %arg3[%c0_8, %c0_9] : memref<16x128xf32, #tpu.memory_space<vmem>>, vector<16x128xf32>
      %16 = arith.subf %14, %15 : vector<16x128xf32>
      %17 = tpu.iota {dimensions = array<i32: 0>} : vector<16x128xi32>
      %c16_i32 = arith.constant 16 : i32
      %18 = arith.muli %1, %c16_i32 : i32
      %19 = vector.broadcast %18 : i32 to vector<16x128xi32>
      %20 = arith.addi %19, %17 : vector<16x128xi32>
      %c16_i32_10 = arith.constant 16 : i32
      %21 = vector.broadcast %c16_i32_10 : i32 to vector<16x128xi32>
      %22 = arith.cmpi slt, %20, %21 : vector<16x128xi32>
      %23 = arith.mulf %16, %16 : vector<16x128xf32>
      %cst = arith.constant 0.000000e+00 : f32
      %24 = vector.broadcast %cst : f32 to vector<16x128xf32>
      %25 = arith.select %22, %23, %24 : vector<16x128xi1>, vector<16x128xf32>
      %c0_11 = arith.constant 0 : index
      %c0_12 = arith.constant 0 : index
      %26 = vector.load %arg5[%c0_11, %c0_12] : memref<8x128xf32, #tpu.memory_space<vmem>>, vector<8x128xf32>
      %27 = vector.shape_cast %25 : vector<16x128xf32> to vector<2x8x128xf32>
      %cst_13 = arith.constant dense<0.000000e+00> : vector<8x128xf32>
      %28 = vector.multi_reduction <add>, %27, %cst_13 [0] : vector<2x8x128xf32> to vector<8x128xf32>
      %29 = arith.addf %26, %28 : vector<8x128xf32>
      %c0_14 = arith.constant 0 : index
      %c0_15 = arith.constant 0 : index
      %30 = vector.load %arg5[%c0_14, %c0_15] : memref<8x128xf32, #tpu.memory_space<vmem>>, vector<8x128xf32>
      tpu.vector_store %arg5[%c0_14, %c0_15], %29 {strides = array<i32>} : memref<8x128xf32, #tpu.memory_space<vmem>>, vector<8x128xf32>,
    } else {
    }
    %c0_i32_5 = arith.constant 0 : i32
    %11 = arith.cmpi eq, %arg1, %c0_i32_5 : i32
    %12 = arith.extui %11 : i1 to i32
    %c0_i32_6 = arith.constant 0 : i32
    %13 = arith.cmpi ne, %12, %c0_i32_6 : i32
    scf.if %13 {
      %c0 = arith.constant 0 : index
      %c0_7 = arith.constant 0 : index
      %14 = vector.load %arg5[%c0, %c0_7] : memref<8x128xf32, #tpu.memory_space<vmem>>, vector<8x128xf32>
      %15 = vector.shape_cast %14 : vector<8x128xf32> to vector<1x8x128xf32>
      %c0_8 = arith.constant 0 : index
      %c0_9 = arith.constant 0 : index
      %c0_10 = arith.constant 0 : index
      %16 = vector.load %arg4[%c0_8, %c0_9, %c0_10] : memref<1x8x128xf32, #tpu.memory_space<vmem>>, vector<1x8x128xf32>
      tpu.vector_store %arg4[%c0_8, %c0_9, %c0_10], %15 {strides = array<i32>} : memref<1x8x128xf32, #tpu.memory_space<vmem>>, vector<1x8x128xf32>,
    } else {
    }
    return
  }
  func.func @transform_0(%arg0: i32, %arg1: i32) -> (i32, i32) {
    %c1_i32 = arith.constant 1 : i32
    %0 = arith.muli %arg0, %c1_i32 : i32
    %1 = arith.addi %0, %arg1 : i32
    %c0_i32 = arith.constant 0 : i32
    %2 = arith.minsi %1, %c0_i32 : i32
    %c0_i32_0 = arith.constant 0 : i32
    %c0_i32_1 = arith.constant 0 : i32
    return %2, %c0_i32_0 : i32, i32
  }
  func.func @transform_1(%arg0: i32, %arg1: i32) -> (i32, i32) {
    %c1_i32 = arith.constant 1 : i32
    %0 = arith.muli %arg0, %c1_i32 : i32
    %1 = arith.addi %0, %arg1 : i32
    %c0_i32 = arith.constant 0 : i32
    %2 = arith.minsi %1, %c0_i32 : i32
    %c0_i32_0 = arith.constant 0 : i32
    %c0_i32_1 = arith.constant 0 : i32
    return %2, %c0_i32_0 : i32, i32
  }
  func.func @transform_2(%arg0: i32, %arg1: i32) -> (i32, i32, i32) {
    %c0_i32 = arith.constant 0 : i32
    %c0_i32_0 = arith.constant 0 : i32
    %c0_i32_1 = arith.constant 0 : i32
    return %arg0, %c0_i32, %c0_i32_0 : i32, i32, i32
  }
}

</mosaic_0001>

<llo_original>
// kernel: mse_loss.1
$region0: #{mse_loss.1}
  #allocation0 [shape = 'u32[]', space=smem, size = 0x4, offset = 0x4, fixed_abs, tag = 'smem constant byte address 0x4 - core index']
  #allocation1 [shape = 'u32[144,128]{1,0:T(1,128)}', space=vmem, size = 0x12000, scoped, tag = 'internal scratch']
  #allocation2 [shape = 'f32[8,128]{1,0:T(8,128)}', space=vmem, size = 0x1000, scoped, tag = 'scratch operand']
  %s0 = inlined_call_operand.vmem [shape: f32[16,128], index: 0, kind: input, shape index: {}]
  %s1 = inlined_call_operand.vmem [shape: f32[16,128], index: 1, kind: input, shape index: {}]
  %s2 = inlined_call_operand.vmem [shape: f32[1,8,128], index: 2, kind: output, shape index: {}]
  %s3 = sld [smem:[#allocation0]]
  $region34: #{mse_loss.1} parent=0
    _
  %s5 = ssub.s32 1, %s3
  %s6 = scalar_select 0, %s5, %s3
  // Predicated region
  $region2: #{mse_loss.1} parent=0 // pred_check
    _
  $region3: #{mse_loss.1} parent=0 // pred_check_branch
    %8 = sbr.rel (0) target = $region5
  $region4: #{mse_loss.1} parent=0 // pred_region
    %s9 = sadd.s32 0, 0
    %p10 = scmp.lt.s32.totalorder %s9, 0
    %s11 = scalar_select %p10, %s9, 0
    %s12 = smul.u32 2, %s11
    %p13 = scmp.lt.s32.totalorder %s12, 1
    %s14 = scalar_select %p13, %s12, 1
    %s15 = smul.addr %s14, 8
    %s16 = scalar_lea.vmem %s0, %s15
    %s17 = sadd.s32 0, 0
    %p18 = scmp.lt.s32.totalorder %s17, 0
    %s19 = scalar_select %p18, %s17, 0
    %s20 = smul.u32 2, %s19
  $region5: #{mse_loss.1} parent=0 // pred_fallthru
    _
  // Predicated region
  $region6: #{mse_loss.1} parent=0 // pred_check
    _
  $region7: #{mse_loss.1} parent=0 // pred_check_branch
    %22 = sbr.rel (0) target = $region9
  $region8: #{mse_loss.1} parent=0 // pred_region
    %s23 = sadd.s32 0, 0
    %p24 = scmp.lt.s32.totalorder %s23, 0
    %s25 = scalar_select %p24, %s23, 0
    %s26 = smul.u32 2, %s25
    %p27 = scmp.lt.s32.totalorder %s26, 1
    %s28 = scalar_select %p27, %s26, 1
    %s29 = smul.addr %s28, 8
    %s30 = scalar_lea.vmem %s1, %s29
    %s31 = sadd.s32 0, 0
    %p32 = scmp.lt.s32.totalorder %s31, 0
    %s33 = scalar_select %p32, %s31, 0
    %s34 = smul.u32 2, %s33
  $region9: #{mse_loss.1} parent=0 // pred_fallthru
    _
  %s35 = sadd.s32 0, 0
  %p36 = scmp.lt.s32.totalorder %s35, 0
  %s37 = scalar_select %p36, %s35, 0
  %s38 = smul.u32 2, %s37
  %p39 = scmp.lt.s32.totalorder %s38, 1
  %s40 = scalar_select %p39, %s38, 1
  %s41 = smul.addr %s40, 8
  %s42 = scalar_lea.vmem %s0, %s41
  %s43 = sadd.s32 0, 0
  %p44 = scmp.lt.s32.totalorder %s43, 0
  %s45 = scalar_select %p44, %s43, 0
  %s46 = smul.u32 2, %s45
  %p47 = scmp.lt.s32.totalorder %s46, 1
  %s48 = scalar_select %p47, %s46, 1
  %s49 = smul.addr %s48, 8
  %s50 = scalar_lea.vmem %s1, %s49
  %s51 = sadd.s32 0, 0
  %p52 = scmp.lt.s32.totalorder %s51, 0
  %s53 = scalar_select %p52, %s51, 0
  %s54 = smul.u32 2, %s53
  %p55 = scmp.lt.s32.totalorder %s54, 1
  %s56 = scalar_select %p55, %s54, 1
  %s57 = smul.addr %s56, 8
  %s58 = scalar_lea.vmem %s0, %s57
  %s59 = sadd.s32 0, 0
  %p60 = scmp.lt.s32.totalorder %s59, 0
  %s61 = scalar_select %p60, %s59, 0
  %s62 = smul.u32 2, %s61
  %s63 = sadd.s32 0, 0
  %p64 = scmp.lt.s32.totalorder %s63, 0
  %s65 = scalar_select %p64, %s63, 0
  %s66 = smul.u32 2, %s65
  %p67 = scmp.lt.s32.totalorder %s66, 1
  %s68 = scalar_select %p67, %s66, 1
  %s69 = smul.addr %s68, 8
  %s70 = scalar_lea.vmem %s1, %s69
  %s71 = sadd.s32 0, 0
  %p72 = scmp.lt.s32.totalorder %s71, 0
  %s73 = scalar_select %p72, %s71, 0
  %s74 = smul.u32 2, %s73
  %s75 = sadd.s32 0, 0
  %p76 = scmp.eq.s32.totalorder 0, 0
  // Predicated region
  $region10: #{mse_loss.1} parent=0 // pred_check
    %p77 = pneg %p76
  $region11: #{mse_loss.1} parent=0 // pred_check_branch
    %79 = sbr.rel (%p77) target = $region13
  $region12: #{mse_loss.1} parent=0 // pred_region
    %80 = vst [vmem:[#allocation2] sm:$0xff] 0.0
  $region13: #{mse_loss.1} parent=0 // pred_fallthru
    _
  %p81 = scmp.lt.s32.totalorder %s75, 1
  // Predicated region
  $region14: #{mse_loss.1} parent=0 // pred_check
    %p82 = pneg %p81
  $region15: #{mse_loss.1} parent=0 // pred_check_branch
    %84 = sbr.rel (%p82) target = $region17
  $region16: #{mse_loss.1} parent=0 // pred_region
    %v85 = vld [vmem:[%s58] sm:$0xff]
    %v86 = vld [vmem:[%s58 + $0x8] sm:$0xff]
    %v87 = vld [vmem:[%s70] sm:$0xff]
    %v88 = vld [vmem:[%s70 + $0x8] sm:$0xff]
    %v89 = vsub.f32 %v85, %v87
    %v90 = vsub.f32 %v86, %v88
    %v91 = vld [vmem:[#allocation2] sm:$0xff]
    %v92 = vmul.f32 %v89, %v89
    %v93 = vmul.f32 %v90, %v90
    %v94 = vadd.f32 %v92, %v93
    %v95 = vadd.f32 %v91, %v94
    %96 = vst [vmem:[#allocation2] sm:$0xff] %v95
  $region17: #{mse_loss.1} parent=0 // pred_fallthru
    _
  %p97 = scmp.ge.s32.totalorder %s75, 1
  // Predicated region
  $region18: #{mse_loss.1} parent=0 // pred_check
    %p98 = pneg %p97
  $region19: #{mse_loss.1} parent=0 // pred_check_branch
    %100 = sbr.rel (%p98) target = $region21
  $region20: #{mse_loss.1} parent=0 // pred_region
    %v101 = vld [vmem:[%s58] sm:$0xff]
    %v102 = vld [vmem:[%s58 + $0x8] sm:$0xff]
    %v103 = vld [vmem:[%s70] sm:$0xff]
    %v104 = vld [vmem:[%s70 + $0x8] sm:$0xff]
    %v105 = vsub.f32 %v101, %v103
    %v106 = vsub.f32 %v102, %v104
    %v107 = vlaneseq
    %v108 = vshrl.u32 %v107, 7
    %v109 = vadd.s32 %v108, 8
    %s110 = smul.u32 %s75, 16
    %v111 = vstv %s110
    %v112 = vadd.s32 %v111, %v108
    %v113 = vadd.s32 %v111, %v109
    %vm114 = vcmp.lt.s32.totalorder %v112, 16
    %vm115 = vcmp.lt.s32.totalorder %v113, 16
    %v116 = vmul.f32 %v105, %v105
    %v117 = vmul.f32 %v106, %v106
    %v118 = vsel %vm114, %v116, 0.0
    %v119 = vsel %vm115, %v117, 0.0
    %v120 = vld [vmem:[#allocation2] sm:$0xff]
    %v121 = vadd.f32 %v118, %v119
    %v122 = vadd.f32 %v120, %v121
    %123 = vst [vmem:[#allocation2] sm:$0xff] %v122
  $region21: #{mse_loss.1} parent=0 // pred_fallthru
    _
  // Predicated region
  $region22: #{mse_loss.1} parent=0 // pred_check
    %p124 = pneg %p76
  $region23: #{mse_loss.1} parent=0 // pred_check_branch
    %126 = sbr.rel (%p124) target = $region25
  $region24: #{mse_loss.1} parent=0 // pred_region
    %v127 = vld [vmem:[#allocation2] sm:$0xff]
    %128 = vst [vmem:[%s2] sm:$0xff] %v127
  $region25: #{mse_loss.1} parent=0 // pred_fallthru
    _
  // Predicated region
  $region26: #{mse_loss.1} parent=0 // pred_check
    _
  $region27: #{mse_loss.1} parent=0 // pred_check_branch
    %130 = sbr.rel (0) target = $region29
  $region28: #{mse_loss.1} parent=0 // pred_region
    _
  $region29: #{mse_loss.1} parent=0 // pred_fallthru
    _
  // Predicated region
  $region30: #{mse_loss.1} parent=0 // pred_check
    _
  $region31: #{mse_loss.1} parent=0 // pred_check_branch
    %132 = sbr.rel (0) target = $region33
  $region32: #{mse_loss.1} parent=0 // pred_region
    _
  $region33: #{mse_loss.1} parent=0 // pred_fallthru
    _

</llo_original>
